<compile_context>
chip_gen: v7x
topology: tpu7x:2x2x1
jax: 0.10.0
libtpu: 0.0.40
codegen_flags: <defaults>
</compile_context>

<pallas_src>
import functools

import jax
import jax.numpy as jnp
from jax.experimental import pallas as pl
from jax.experimental.pallas import tpu as pltpu


# --------------------------------------------------------------------------
# shared tile computation
# --------------------------------------------------------------------------
def _tile_loss(af, al, cf, cl, not_diag, *, temperature, base_temperature):
    """Per-row GenSupCon loss for one anchor-row tile.

    af: [tm, D]  anchor features (native dtype, fed straight to the MXU)
    al: [tm, C]  anchor labels   (float32)
    cf: [Mc, D]  contrast features
    cl: [Mc, C]  contrast labels (float32)
    not_diag: bool [tm, Mc] (True off-diagonal) or None when no diag masking.
    Returns [tm, 1] float32 per-anchor loss.
    """
    dims = (((1,), (1,)), ((), ()))   # contract last dim of both operands

    # feature logits: fold 1/temperature into the (small) anchor tile
    inv_t = 1.0 / temperature
    adc = jax.lax.dot_general(af * inv_t, cf, dims,
                              preferred_element_type=jnp.float32)     # [tm, Mc]
    lmax = jnp.max(adc, axis=1, keepdims=True)                        # [tm, 1]

    # label cosine mask: fold the inverse norms into the matmul operands
    inv_an = jax.lax.rsqrt(jnp.sum(al * al, axis=1, keepdims=True))   # [tm, 1]
    inv_cn = jax.lax.rsqrt(jnp.sum(cl * cl, axis=1, keepdims=True))   # [Mc, 1]
    als = al * inv_an                                                 # [tm, C]
    cls = cl * inv_cn                                                 # [Mc, C]
    cos = jax.lax.dot_general(als, cls, dims,
                              preferred_element_type=jnp.float32)     # [tm, Mc]

    # analytic row sum of the mask: sum_j cos_ij = als_i . sum_j cls_j
    s = jnp.sum(cls, axis=0, keepdims=True)                           # [1, C]
    row_mask_sum = jnp.sum(als * s, axis=1, keepdims=True)            # [tm, 1]

    e = jnp.exp(adc - lmax)
    if not_diag is not None:
        mask = jnp.where(not_diag, cos, 0.0)
        e = jnp.where(not_diag, e, 0.0)
        row_mask_sum = row_mask_sum - 1.0    # remove the self-cosine (==1)
    else:
        mask = cos

    exp_sum = jnp.sum(e, axis=1, keepdims=True)                       # [tm, 1]
    lse = lmax + jnp.log(exp_sum)                                     # [tm, 1]
    num = jnp.sum(mask * adc, axis=1, keepdims=True)                  # [tm, 1]

    # sum(mask*log_prob) = sum(mask*adc) - row_mask_sum * lse
    mlpp = (num - row_mask_sum * lse) / (row_mask_sum + 1e-8)
    return (-(temperature / base_temperature)) * mlpp


# --------------------------------------------------------------------------
# kernels
# --------------------------------------------------------------------------
def _gensupcon_all_kernel(feat_ref, lab_ref, out_ref, *,
                          tm, temperature, base_temperature):
    """contrast_mode='all': one [M,D]/[M,C] input pair, reused for both roles."""
    i = pl.program_id(0)
    row_start = pl.multiple_of(i * tm, tm)
    m = feat_ref.shape[0]

    cf = feat_ref[...]                              # [M, D] (resident once)
    cl = lab_ref[...]                               # [M, C]
    af = feat_ref[pl.ds(row_start, tm), :]          # [tm, D]
    al = lab_ref[pl.ds(row_start, tm), :]           # [tm, C]

    rows = jax.lax.broadcasted_iota(jnp.int32, (tm, m), 0) + row_start
    cols = jax.lax.broadcasted_iota(jnp.int32, (tm, m), 1)
    not_diag = rows != cols

    out_ref[...] = _tile_loss(
        af, al, cf, cl, not_diag,
        temperature=temperature, base_temperature=base_temperature,
    ).astype(out_ref.dtype)


def _gensupcon_one_kernel(af_ref, al_ref, cf_ref, cl_ref, out_ref, *,
                          temperature, base_temperature):
    """contrast_mode='one': no diagonal masking at all."""
    out_ref[...] = _tile_loss(
        af_ref[...], al_ref[...], cf_ref[...], cl_ref[...], None,
        temperature=temperature, base_temperature=base_temperature,
    ).astype(out_ref.dtype)


# --------------------------------------------------------------------------
# wrapper
# --------------------------------------------------------------------------
def _pick_row_tile(n_rows, n_cols):
    # keep ~4 live f32 [tm, n_cols] temporaries under ~16 MiB
    budget = max(8, (1 << 20) // max(n_cols, 1))
    for t in (512, 256, 128, 64, 32, 16, 8):
        if t <= budget and n_rows % t == 0:
            return t
    return n_rows


def gen_sup_con_loss(features, labels, *, temperature=0.07,
                     contrast_mode='all', base_temperature=0.07,
                     row_block=None):
    """features: (anchor_feat, contrast_feat), each [N, D];
       labels:   (anchor_lab,  contrast_lab ), each [N, C]."""
    temperature = float(temperature)
    base_temperature = float(base_temperature)
    cparams = dict(dimension_semantics=("parallel",),
                   vmem_limit_bytes=32 * 1024 * 1024)

    if contrast_mode == 'all':
        feat = jnp.concatenate(features, axis=0)                 # [2N, D]
        lab = jnp.concatenate(labels, axis=0).astype(jnp.float32)  # [2N, C]
        m, d = feat.shape
        c = lab.shape[1]
        tm = row_block if row_block is not None else _pick_row_tile(m, m)
        if m % tm != 0:
            tm = m

        kernel = functools.partial(
            _gensupcon_all_kernel, tm=tm,
            temperature=temperature, base_temperature=base_temperature)
        cost = pl.CostEstimate(
            flops=2 * m * m * (d + c) + 8 * m * m,
            transcendentals=m * m + 2 * m,
            bytes_accessed=int(feat.size) * feat.dtype.itemsize
                           + int(lab.size) * 4 + m * 4)

        per_row = pl.pallas_call(
            kernel,
            out_shape=jax.ShapeDtypeStruct((m, 1), jnp.float32),
            grid_spec=pltpu.PrefetchScalarGridSpec(
                num_scalar_prefetch=0,
                grid=(m // tm,),
                in_specs=[pl.BlockSpec((m, d), lambda i: (0, 0)),   # features, once
                          pl.BlockSpec((m, c), lambda i: (0, 0))],  # labels, once
                out_specs=pl.BlockSpec((tm, 1), lambda i: (i, 0))),
            compiler_params=pltpu.CompilerParams(**cparams),
            cost_estimate=cost,
        )(feat, lab)
        return jnp.mean(per_row)

    elif contrast_mode == 'one':
        af, cf = features[0], features[1]
        al = labels[0].astype(jnp.float32)
        cl = labels[1].astype(jnp.float32)
        ma, d = af.shape
        mc = cf.shape[0]
        c = al.shape[1]
        tm = row_block if row_block is not None else _pick_row_tile(ma, mc)
        if ma % tm != 0:
            tm = ma

        kernel = functools.partial(
            _gensupcon_one_kernel,
            temperature=temperature, base_temperature=base_temperature)
        cost = pl.CostEstimate(
            flops=2 * ma * mc * (d + c) + 8 * ma * mc,
            transcendentals=ma * mc + ma + mc,
            bytes_accessed=int(af.size + cf.size) * af.dtype.itemsize
                           + int(al.size + cl.size) * 4 + ma * 4)

        per_row = pl.pallas_call(
            kernel,
            out_shape=jax.ShapeDtypeStruct((ma, 1), jnp.float32),
            grid_spec=pltpu.PrefetchScalarGridSpec(
                num_scalar_prefetch=0,
                grid=(ma // tm,),
                in_specs=[pl.BlockSpec((tm, d), lambda i: (i, 0)),  # anchor feats
                          pl.BlockSpec((tm, c), lambda i: (i, 0)),  # anchor labels
                          pl.BlockSpec((mc, d), lambda i: (0, 0)),  # contrast feats
                          pl.BlockSpec((mc, c), lambda i: (0, 0))], # contrast labels
                out_specs=pl.BlockSpec((tm, 1), lambda i: (i, 0))),
            compiler_params=pltpu.CompilerParams(**cparams),
            cost_estimate=cost,
        )(af, al, cf, cl)
        return jnp.mean(per_row)

    else:
        raise ValueError(contrast_mode)


# --------------------------------------------------------------------------
# pure-JAX reference (mirrors the PyTorch module) for sanity checking
# --------------------------------------------------------------------------
def _reference(features, labels, *, temperature=0.07, contrast_mode='all',
               base_temperature=0.07):
    if contrast_mode == 'all':
        al = jnp.concatenate(labels, axis=0).astype(jnp.float32); cl = al
        af = jnp.concatenate(features, axis=0).astype(jnp.float32); cf = af
    else:
        al = labels[0].astype(jnp.float32); cl = labels[1].astype(jnp.float32)
        af = features[0].astype(jnp.float32); cf = features[1].astype(jnp.float32)
    an = jnp.linalg.norm(al, axis=-1, keepdims=True)
    cn = jnp.linalg.norm(cl, axis=-1, keepdims=True)
    mask = (al @ cl.T) / (an @ cn.T)
    logits_mask = jnp.ones_like(mask)
    if contrast_mode == 'all':
        logits_mask = logits_mask - jnp.eye(mask.shape[0], dtype=jnp.float32)
    mask = mask * logits_mask
    adc = (af @ cf.T) / temperature
    logits = adc - jnp.max(adc, axis=1, keepdims=True)
    exp_logits = jnp.exp(logits) * logits_mask
    log_prob = logits - jnp.log(jnp.sum(exp_logits, axis=1, keepdims=True))
    mlpp = jnp.sum(mask * log_prob, axis=1) / (jnp.sum(mask, axis=1) + 1e-8)
    return jnp.mean(-(temperature / base_temperature) * mlpp)


if __name__ == "__main__":
    key = jax.random.PRNGKey(0)
    k1, k2, k3, k4 = jax.random.split(key, 4)

    N, D, C = 8, 32, 4  # batch, feat_dim, num_cls
    f_a = jax.random.normal(k1, (N, D), dtype=jnp.float32)
    f_c = jax.random.normal(k2, (N, D), dtype=jnp.float32)
    f_a = f_a / jnp.linalg.norm(f_a, axis=-1, keepdims=True)
    f_c = f_c / jnp.linalg.norm(f_c, axis=-1, keepdims=True)
    l_a = jax.nn.softmax(jax.random.normal(k3, (N, C), dtype=jnp.float32), axis=-1)
    l_c = jax.nn.softmax(jax.random.normal(k4, (N, C), dtype=jnp.float32), axis=-1)

    # contrast_mode='all', single row tile
    loss_all = jax.block_until_ready(gen_sup_con_loss((f_a, f_c), (l_a, l_c)))
    ref_all = _reference((f_a, f_c), (l_a, l_c), contrast_mode='all')
    assert jnp.allclose(loss_all, ref_all, rtol=1e-4, atol=1e-4), (loss_all, ref_all)

    # contrast_mode='all', force a 2-tile grid to exercise the tiled path
    loss_all_t = jax.block_until_ready(
        gen_sup_con_loss((f_a, f_c), (l_a, l_c), row_block=8))
    assert jnp.allclose(loss_all_t, ref_all, rtol=1e-4, atol=1e-4), (loss_all_t, ref_all)

    # contrast_mode='one'
    loss_one = jax.block_until_ready(
        gen_sup_con_loss((f_a, f_c), (l_a, l_c), contrast_mode='one'))
    ref_one = _reference((f_a, f_c), (l_a, l_c), contrast_mode='one')
    assert jnp.allclose(loss_one, ref_one, rtol=1e-4, atol=1e-4), (loss_one, ref_one)

    print("KERNEL_OK")
</pallas_src>

<mosaic_0001>
module attributes {stable_mosaic.version = 11 : i64} {
  func.func @_gensupcon_all_kernel(%arg0: i32, %arg1: memref<16x32xf32, #tpu.memory_space<vmem>>, %arg2: memref<16x4xf32, #tpu.memory_space<vmem>>, %arg3: memref<16x1xf32, #tpu.memory_space<vmem>>) attributes {dimension_semantics = [#tpu.dimension_semantics<parallel>], iteration_bounds = array<i64: 1>, scalar_prefetch = 0 : i64, scratch_operands = 0 : i64, tpu.core_type = #tpu.core_type<tc>, window_params = [{pipeline_mode = #tpu.pipeline_mode<synchronous>, transform_indices = @transform_0, window_bounds = array<i64: 16, 32>}, {pipeline_mode = #tpu.pipeline_mode<synchronous>, transform_indices = @transform_1, window_bounds = array<i64: 16, 4>}, {transform_indices = @transform_2, window_bounds = array<i64: 16, 1>}]} {
    %c16_i32 = arith.constant 16 : i32
    %0 = arith.muli %arg0, %c16_i32 : i32
    %1 = tpu.assume_multiple %0, 16 : i32
    %c0 = arith.constant 0 : index
    %c0_0 = arith.constant 0 : index
    %2 = vector.load %arg1[%c0, %c0_0] : memref<16x32xf32, #tpu.memory_space<vmem>>, vector<16x32xf32>
    %c0_1 = arith.constant 0 : index
    %c0_2 = arith.constant 0 : index
    %3 = vector.load %arg2[%c0_1, %c0_2] : memref<16x4xf32, #tpu.memory_space<vmem>>, vector<16x4xf32>
    %4 = arith.index_cast %1 : i32 to index
    %c0_3 = arith.constant 0 : index
    %5 = vector.load %arg1[%4, %c0_3] : memref<16x32xf32, #tpu.memory_space<vmem>>, vector<16x32xf32>
    %6 = arith.index_cast %1 : i32 to index
    %c0_4 = arith.constant 0 : index
    %7 = vector.load %arg2[%6, %c0_4] : memref<16x4xf32, #tpu.memory_space<vmem>>, vector<16x4xf32>
    %8 = tpu.iota {dimensions = array<i32: 0>} : vector<16x16xi32>
    %9 = vector.broadcast %1 : i32 to vector<16x16xi32>
    %10 = arith.addi %8, %9 : vector<16x16xi32>
    %11 = tpu.iota {dimensions = array<i32: 1>} : vector<16x16xi32>
    %12 = arith.cmpi ne, %10, %11 : vector<16x16xi32>
    %cst = arith.constant 14.2857141 : f32
    %13 = vector.broadcast %cst : f32 to vector<16x32xf32>
    %14 = arith.mulf %5, %13 : vector<16x32xf32>
    %cst_5 = arith.constant dense<0.000000e+00> : vector<16x16xf32>
    %15 = tpu.matmul %14, %2, %cst_5 {dimension_numbers = #tpu.dot_dimension_numbers<[1], [1], [0], [0], [0, 0, 1, 0], [], []>} : vector<16x32xf32>, vector<16x32xf32>, vector<16x16xf32> -> vector<16x16xf32>
    %cst_6 = arith.constant dense<0xFF800000> : vector<16xf32>
    %16 = vector.multi_reduction <maximumf>, %15, %cst_6 [1] : vector<16x16xf32> to vector<16xf32>
    %17 = vector.shape_cast %16 : vector<16xf32> to vector<16x1xf32>
    %18 = arith.mulf %7, %7 : vector<16x4xf32>
    %cst_7 = arith.constant dense<0.000000e+00> : vector<16xf32>
    %19 = vector.multi_reduction <add>, %18, %cst_7 [1] : vector<16x4xf32> to vector<16xf32>
    %20 = vector.shape_cast %19 : vector<16xf32> to vector<16x1xf32>
    %21 = math.rsqrt %20 : vector<16x1xf32>
    %22 = arith.mulf %3, %3 : vector<16x4xf32>
    %cst_8 = arith.constant dense<0.000000e+00> : vector<16xf32>
    %23 = vector.multi_reduction <add>, %22, %cst_8 [1] : vector<16x4xf32> to vector<16xf32>
    %24 = vector.shape_cast %23 : vector<16xf32> to vector<16x1xf32>
    %25 = math.rsqrt %24 : vector<16x1xf32>
    %26 = vector.broadcast %21 : vector<16x1xf32> to vector<16x4xf32>
    %27 = arith.mulf %7, %26 : vector<16x4xf32>
    %28 = vector.broadcast %25 : vector<16x1xf32> to vector<16x4xf32>
    %29 = arith.mulf %3, %28 : vector<16x4xf32>
    %cst_9 = arith.constant dense<0.000000e+00> : vector<16x16xf32>
    %30 = tpu.matmul %27, %29, %cst_9 {dimension_numbers = #tpu.dot_dimension_numbers<[1], [1], [0], [0], [0, 0, 1, 0], [], []>} : vector<16x4xf32>, vector<16x4xf32>, vector<16x16xf32> -> vector<16x16xf32>
    %cst_10 = arith.constant dense<0.000000e+00> : vector<4xf32>
    %31 = vector.multi_reduction <add>, %29, %cst_10 [0] : vector<16x4xf32> to vector<4xf32>
    %32 = vector.shape_cast %31 : vector<4xf32> to vector<1x4xf32>
    %33 = vector.broadcast %32 : vector<1x4xf32> to vector<16x4xf32>
    %34 = arith.mulf %27, %33 : vector<16x4xf32>
    %cst_11 = arith.constant dense<0.000000e+00> : vector<16xf32>
    %35 = vector.multi_reduction <add>, %34, %cst_11 [1] : vector<16x4xf32> to vector<16xf32>
    %36 = vector.shape_cast %35 : vector<16xf32> to vector<16x1xf32>
    %37 = vector.broadcast %17 : vector<16x1xf32> to vector<16x16xf32>
    %38 = arith.subf %15, %37 : vector<16x16xf32>
    %39 = math.exp %38 : vector<16x16xf32>
    %cst_12 = arith.constant 0.000000e+00 : f32
    %40 = vector.broadcast %cst_12 : f32 to vector<16x16xf32>
    %41 = arith.select %12, %30, %40 : vector<16x16xi1>, vector<16x16xf32>
    %cst_13 = arith.constant 0.000000e+00 : f32
    %42 = vector.broadcast %cst_13 : f32 to vector<16x16xf32>
    %43 = arith.select %12, %39, %42 : vector<16x16xi1>, vector<16x16xf32>
    %cst_14 = arith.constant 1.000000e+00 : f32
    %44 = vector.broadcast %cst_14 : f32 to vector<16x1xf32>
    %45 = arith.subf %36, %44 : vector<16x1xf32>
    %cst_15 = arith.constant dense<0.000000e+00> : vector<16xf32>
    %46 = vector.multi_reduction <add>, %43, %cst_15 [1] : vector<16x16xf32> to vector<16xf32>
    %47 = vector.shape_cast %46 : vector<16xf32> to vector<16x1xf32>
    %48 = math.log %47 : vector<16x1xf32>
    %49 = arith.addf %17, %48 : vector<16x1xf32>
    %50 = arith.mulf %41, %15 : vector<16x16xf32>
    %cst_16 = arith.constant dense<0.000000e+00> : vector<16xf32>
    %51 = vector.multi_reduction <add>, %50, %cst_16 [1] : vector<16x16xf32> to vector<16xf32>
    %52 = vector.shape_cast %51 : vector<16xf32> to vector<16x1xf32>
    %53 = arith.mulf %45, %49 : vector<16x1xf32>
    %54 = arith.subf %52, %53 : vector<16x1xf32>
    %cst_17 = arith.constant 9.99999993E-9 : f32
    %55 = vector.broadcast %cst_17 : f32 to vector<16x1xf32>
    %56 = arith.addf %45, %55 : vector<16x1xf32>
    %57 = arith.divf %54, %56 : vector<16x1xf32>
    %cst_18 = arith.constant -1.000000e+00 : f32
    %58 = vector.broadcast %cst_18 : f32 to vector<16x1xf32>
    %59 = arith.mulf %58, %57 : vector<16x1xf32>
    %c0_19 = arith.constant 0 : index
    %c0_20 = arith.constant 0 : index
    %60 = vector.load %arg3[%c0_19, %c0_20] : memref<16x1xf32, #tpu.memory_space<vmem>>, vector<16x1xf32>
    tpu.vector_store %arg3[%c0_19, %c0_20], %59 {strides = array<i32>} : memref<16x1xf32, #tpu.memory_space<vmem>>, vector<16x1xf32>,
    return
  }
  func.func @transform_0(%arg0: i32) -> (i32, i32) {
    %c0_i32 = arith.constant 0 : i32
    %c0_i32_0 = arith.constant 0 : i32
    %c0_i32_1 = arith.constant 0 : i32
    return %c0_i32, %c0_i32_0 : i32, i32
  }
  func.func @transform_1(%arg0: i32) -> (i32, i32) {
    %c0_i32 = arith.constant 0 : i32
    %c0_i32_0 = arith.constant 0 : i32
    %c0_i32_1 = arith.constant 0 : i32
    return %c0_i32, %c0_i32_0 : i32, i32
  }
  func.func @transform_2(%arg0: i32) -> (i32, i32) {
    %c0_i32 = arith.constant 0 : i32
    %c0_i32_0 = arith.constant 0 : i32
    return %arg0, %c0_i32 : i32, i32
  }
}

</mosaic_0001>

<llo_original>
// kernel: tpu_custom_call.1
$region0: #{tpu_custom_call.1}
  #allocation0 [shape = 'u32[]', space=smem, size = 0x4, offset = 0x4, fixed_abs, tag = 'smem constant byte address 0x4 - core index']
  #allocation1 [shape = 'u32[144,128]{1,0:T(1,128)}', space=vmem, size = 0x12000, scoped, tag = 'internal scratch']
  %s0 = inlined_call_operand.vmem [shape: f32[16,32], index: 0, kind: input, shape index: {}]
  %s1 = inlined_call_operand.vmem [shape: f32[16,4], index: 1, kind: input, shape index: {}]
  %s2 = inlined_call_operand.vmem [shape: f32[16,1], index: 2, kind: output, shape index: {}]
  %s3 = sld [smem:[#allocation0]]
  $region18: #{tpu_custom_call.1} parent=0
    _
  %s5 = ssub.s32 1, %s3
  %s6 = scalar_select 0, %s5, %s3
  // Predicated region
  $region2: #{tpu_custom_call.1} parent=0 // pred_check
    _
  $region3: #{tpu_custom_call.1} parent=0 // pred_check_branch
    %8 = sbr.rel (0) target = $region5
  $region4: #{tpu_custom_call.1} parent=0 // pred_region
    _
  $region5: #{tpu_custom_call.1} parent=0 // pred_fallthru
    _
  // Predicated region
  $region6: #{tpu_custom_call.1} parent=0 // pred_check
    _
  $region7: #{tpu_custom_call.1} parent=0 // pred_check_branch
    %10 = sbr.rel (0) target = $region9
  $region8: #{tpu_custom_call.1} parent=0 // pred_region
    _
  $region9: #{tpu_custom_call.1} parent=0 // pred_fallthru
    _
  %s11 = smul.u32 0, 16
  %v12 = vld [vmem:[%s0] sm:$0xff]
  %v13 = vld [vmem:[%s0 + $0x8] sm:$0xff]
  %v14 = vld [vmem:[%s1] sm:$0xff]
  %v15 = vld [vmem:[%s1 + $0x8] sm:$0xff]
  %s16 = scalar_lea.vmem %s0, %s11
  %v17 = vld [vmem:[%s16] sm:$0xff]
  %v18 = vld [vmem:[%s16 + $0x8] sm:$0xff]
  %s19 = scalar_lea.vmem %s1, %s11
  %v20 = vld [vmem:[%s19] sm:$0xff]
  %v21 = vld [vmem:[%s19 + $0x8] sm:$0xff]
  %v22 = vlaneseq
  %v23 = vshrl.u32 %v22, 7
  %v24 = vadd.s32 %v23, 8
  %v25 = vstv %s11
  %v26 = vadd.s32 %v23, %v25
  %v27 = vadd.s32 %v24, %v25
  %v28 = vlaneseq
  %v29 = vand.u32 %v28, 127
  %vm30 = vcmp.ne.s32.totalorder %v26, %v29
  %vm31 = vcmp.ne.s32.totalorder %v27, %v29
  %v32 = vmul.f32 %v17, 14.285714
  %v33 = vmul.f32 %v18, 14.285714
  %vm34 = vcmask 261120
  %v36 = vsel %vm34, %v32, 0
  %v39 = vsel %vm34, %v33, 0
  %v42 = vsel %vm34, %v12, 0
  %v45 = vsel %vm34, %v13, 0
  %47 = vmatprep.subr.mxu0 0.0
  %48 = vmatpush1.xpose.msra.mxu0 %v42
  %49 = vmatprep.subr.mxu0 0.0
  %50 = vmatpush1.xpose.msra.mxu0 %v45
  %51 = vmatprep.subr.mxu0 0.0
  %52 = vmatpush1.xpose.msra.mxu0 0.0
  %53 = vmatprep.subr.mxu0 0.0
  %54 = vmatpush1.xpose.msra.mxu0 0.0
  %55 = vmatprep.subr.mxu0 0.0
  %56 = vmatpush1.xpose.msra.mxu0 0.0
  %57 = vmatprep.subr.mxu0 0.0
  %58 = vmatpush1.xpose.msra.mxu0 0.0
  %59 = vmatprep.subr.mxu0 0.0
  %60 = vmatpush1.xpose.msra.mxu0 0.0
  %61 = vmatprep.subr.mxu0 0.0
  %62 = vmatpush1.xpose.msra.mxu0 0.0
  %63 = vmatprep.subr.mxu0 0.0
  %64 = vmatpush1.xpose.msra.mxu0 0.0
  %65 = vmatprep.subr.mxu0 0.0
  %66 = vmatpush1.xpose.msra.mxu0 0.0
  %67 = vmatprep.subr.mxu0 0.0
  %68 = vmatpush1.xpose.msra.mxu0 0.0
  %69 = vmatprep.subr.mxu0 0.0
  %70 = vmatpush1.xpose.msra.mxu0 0.0
  %71 = vmatprep.subr.mxu0 0.0
  %72 = vmatpush1.xpose.msra.mxu0 0.0
  %73 = vmatprep.subr.mxu0 0.0
  %74 = vmatpush1.xpose.msra.mxu0 0.0
  %75 = vmatprep.subr.mxu0 0.0
  %76 = vmatpush1.xpose.msra.mxu0 0.0
  %77 = vmatprep.subr.mxu0 0.0
  %78 = vmatpush1.xpose.msra.mxu0 0.0
  %79 = vmatprep.subr.mxu0 0.0
  %80 = vmatpush1.xpose.msra.mxu0 0.0
  %81 = vmatprep.subr.mxu0 0.0
  %82 = vmatpush1.xpose.msra.mxu0 0.0
  %83 = vmatprep.subr.mxu0 0.0
  %84 = vmatpush1.xpose.msra.mxu0 0.0
  %85 = vmatprep.subr.mxu0 0.0
  %86 = vmatpush1.xpose.msra.mxu0 0.0
  %87 = vmatprep.subr.mxu0 0.0
  %88 = vmatpush1.xpose.msra.mxu0 0.0
  %89 = vmatprep.subr.mxu0 0.0
  %90 = vmatpush1.xpose.msra.mxu0 0.0
  %91 = vmatprep.subr.mxu0 0.0
  %92 = vmatpush1.xpose.msra.mxu0 0.0
  %93 = vmatprep.subr.mxu0 0.0
  %94 = vmatpush1.xpose.msra.mxu0 0.0
  %95 = vmatprep.subr.mxu0 0.0
  %96 = vmatpush1.xpose.msra.mxu0 0.0
  %97 = vmatprep.subr.mxu0 0.0
  %98 = vmatpush1.xpose.msra.mxu0 0.0
  %99 = vmatprep.subr.mxu0 0.0
  %100 = vmatpush1.xpose.msra.mxu0 0.0
  %101 = vmatprep.subr.mxu0 0.0
  %102 = vmatpush1.xpose.msra.mxu0 0.0
  %103 = vmatprep.subr.mxu0 0.0
  %104 = vmatpush1.xpose.msra.mxu0 0.0
  %105 = vmatprep.subr.mxu0 0.0
  %106 = vmatpush1.xpose.msra.mxu0 0.0
  %107 = vmatprep.subr.mxu0 0.0
  %108 = vmatpush1.xpose.msra.mxu0 0.0
  %109 = vmatprep.subr.mxu0 0.0
  %110 = vmatpush1.xpose.msra.mxu0 0.0
  %111 = vmatprep.mubr.f32.mxu0 0.0
  %112 = vmatmul.mubr.f32.gmra.mrb[0].mxu0 %v36
  %v113 = vpop.f32.mrb[0].mxu0
  %v114 = vadd.f32 0.0, %v113
  %v115 = vpop.f32.mrb[0].mxu0
  %116 = vmatprep.mubr.f32.mxu0 0.0
  %117 = vmatmul.mubr.f32.gmra.mrb[0].mxu0 %v39
  %v118 = vpop.f32.mrb[0].mxu0
  %v119 = vadd.f32 0.0, %v118
  %v120 = vpop.f32.mrb[0].mxu0
  %121 = vdwg.mxu0
  %vm122 = vcmask 130048
  %v123 = vsel %vm122, %v114, -inf
  %124 = vmax.xlane.f32.xlu0 %v123
  %v125 = vpop.xlane.xlu0 %124
  %v126 = vsel %vm122, %v119, -inf
  %127 = vmax.xlane.f32.xlu0 %v126
  %v128 = vpop.xlane.xlu0 %127
  %v129 = vmul.f32 %v20, %v20
  %v130 = vmul.f32 %v21, %v21
  %vm131 = vcmask 31744
  %v132 = vsel %vm131, %v129, 0.0
  %133 = vadd.xlane.f32.xlu0 %v132
  %v134 = vpop.xlane.xlu0 %133
  %v135 = vsel %vm131, %v130, 0.0
  %136 = vadd.xlane.f32.xlu0 %v135
  %v137 = vpop.xlane.xlu0 %136
  %v138 = vrsqrt.pop %v134
  %v139 = vrsqrt.pop %v137
  %v140 = vmul.f32 %v14, %v14
  %v141 = vmul.f32 %v15, %v15
  %v142 = vsel %vm131, %v140, 0.0
  %143 = vadd.xlane.f32.xlu0 %v142
  %v144 = vpop.xlane.xlu0 %143
  %v145 = vsel %vm131, %v141, 0.0
  %146 = vadd.xlane.f32.xlu0 %v145
  %v147 = vpop.xlane.xlu0 %146
  %v148 = vrsqrt.pop %v144
  %v149 = vrsqrt.pop %v147
  %v150 = vmul.f32 %v20, %v138
  %v151 = vmul.f32 %v21, %v139
  %v152 = vmul.f32 %v14, %v148
  %v153 = vmul.f32 %v15, %v149
  %v155 = vsel %vm131, %v150, 0
  %v158 = vsel %vm131, %v151, 0
  %v161 = vsel %vm131, %v152, 0
  %v164 = vsel %vm131, %v153, 0
  %166 = vmatprep.subr.mxu0 0.0
  %167 = vmatpush1.xpose.msra.mxu0 %v161
  %168 = vmatprep.subr.mxu0 0.0
  %169 = vmatpush1.xpose.msra.mxu0 %v164
  %170 = vmatprep.subr.mxu0 0.0
  %171 = vmatpush1.xpose.msra.mxu0 0.0
  %172 = vmatprep.subr.mxu0 0.0
  %173 = vmatpush1.xpose.msra.mxu0 0.0
  %174 = vmatprep.subr.mxu0 0.0
  %175 = vmatpush1.xpose.msra.mxu0 0.0
  %176 = vmatprep.subr.mxu0 0.0
  %177 = vmatpush1.xpose.msra.mxu0 0.0
  %178 = vmatprep.subr.mxu0 0.0
  %179 = vmatpush1.xpose.msra.mxu0 0.0
  %180 = vmatprep.subr.mxu0 0.0
  %181 = vmatpush1.xpose.msra.mxu0 0.0
  %182 = vmatprep.subr.mxu0 0.0
  %183 = vmatpush1.xpose.msra.mxu0 0.0
  %184 = vmatprep.subr.mxu0 0.0
  %185 = vmatpush1.xpose.msra.mxu0 0.0
  %186 = vmatprep.subr.mxu0 0.0
  %187 = vmatpush1.xpose.msra.mxu0 0.0
  %188 = vmatprep.subr.mxu0 0.0
  %189 = vmatpush1.xpose.msra.mxu0 0.0
  %190 = vmatprep.subr.mxu0 0.0
  %191 = vmatpush1.xpose.msra.mxu0 0.0
  %192 = vmatprep.subr.mxu0 0.0
  %193 = vmatpush1.xpose.msra.mxu0 0.0
  %194 = vmatprep.subr.mxu0 0.0
  %195 = vmatpush1.xpose.msra.mxu0 0.0
  %196 = vmatprep.subr.mxu0 0.0
  %197 = vmatpush1.xpose.msra.mxu0 0.0
  %198 = vmatprep.subr.mxu0 0.0
  %199 = vmatpush1.xpose.msra.mxu0 0.0
  %200 = vmatprep.subr.mxu0 0.0
  %201 = vmatpush1.xpose.msra.mxu0 0.0
  %202 = vmatprep.subr.mxu0 0.0
  %203 = vmatpush1.xpose.msra.mxu0 0.0
  %204 = vmatprep.subr.mxu0 0.0
  %205 = vmatpush1.xpose.msra.mxu0 0.0
  %206 = vmatprep.subr.mxu0 0.0
  %207 = vmatpush1.xpose.msra.mxu0 0.0
  %208 = vmatprep.subr.mxu0 0.0
  %209 = vmatpush1.xpose.msra.mxu0 0.0
  %210 = vmatprep.subr.mxu0 0.0
  %211 = vmatpush1.xpose.msra.mxu0 0.0
  %212 = vmatprep.subr.mxu0 0.0
  %213 = vmatpush1.xpose.msra.mxu0 0.0
  %214 = vmatprep.subr.mxu0 0.0
  %215 = vmatpush1.xpose.msra.mxu0 0.0
  %216 = vmatprep.subr.mxu0 0.0
  %217 = vmatpush1.xpose.msra.mxu0 0.0
  %218 = vmatprep.subr.mxu0 0.0
  %219 = vmatpush1.xpose.msra.mxu0 0.0
  %220 = vmatprep.subr.mxu0 0.0
  %221 = vmatpush1.xpose.msra.mxu0 0.0
  %222 = vmatprep.subr.mxu0 0.0
  %223 = vmatpush1.xpose.msra.mxu0 0.0
  %224 = vmatprep.subr.mxu0 0.0
  %225 = vmatpush1.xpose.msra.mxu0 0.0
  %226 = vmatprep.subr.mxu0 0.0
  %227 = vmatpush1.xpose.msra.mxu0 0.0
  %228 = vmatprep.subr.mxu0 0.0
  %229 = vmatpush1.xpose.msra.mxu0 0.0
  %230 = vmatprep.mubr.f32.mxu0 0.0
  %231 = vmatmul.mubr.f32.gmra.mrb[0].mxu0 %v155
  %v232 = vpop.f32.mrb[0].mxu0
  %v233 = vadd.f32 0.0, %v232
  %v234 = vpop.f32.mrb[0].mxu0
  %235 = vmatprep.mubr.f32.mxu0 0.0
  %236 = vmatmul.mubr.f32.gmra.mrb[0].mxu0 %v158
  %v237 = vpop.f32.mrb[0].mxu0
  %v238 = vadd.f32 0.0, %v237
  %v239 = vpop.f32.mrb[0].mxu0
  %240 = vdwg.mxu0
  %v241 = vsel %vm131, %v152, 0.0
  %v242 = vsel %vm131, %v153, 0.0
  %v243 = vadd.f32 %v241, %v242
  %v244 = vrot.slane %v243, 4
  %v245 = vadd.f32 %v243, %v244
  %v246 = vrot.slane %v245, 2
  %v247 = vadd.f32 %v245, %v246
  %v248 = vrot.slane %v247, 1
  %v249 = vadd.f32 %v247, %v248
  %v250 = vmul.f32 %v150, %v249
  %v251 = vmul.f32 %v151, %v249
  %v252 = vsel %vm131, %v250, 0.0
  %253 = vadd.xlane.f32.xlu0 %v252
  %v254 = vpop.xlane.xlu0 %253
  %v255 = vsel %vm131, %v251, 0.0
  %256 = vadd.xlane.f32.xlu0 %v255
  %v257 = vpop.xlane.xlu0 %256
  %v258 = vsub.f32 %v114, %v125
  %v259 = vsub.f32 %v119, %v128
  %v260 = vmul.f32 %v258, 1.442695
  %v261 = vpow.pop %v260
  %v262 = vmul.f32 %v259, 1.442695
  %v263 = vpow.pop %v262
  %v264 = vsel %vm30, %v233, 0.0
  %v265 = vsel %vm31, %v238, 0.0
  %v266 = vsel %vm30, %v261, 0.0
  %v267 = vsel %vm31, %v263, 0.0
  %v268 = vsub.f32 %v254, 1.0
  %v269 = vsub.f32 %v257, 1.0
  %v270 = vsel %vm122, %v266, 0.0
  %271 = vadd.xlane.f32.xlu0 %v270
  %v272 = vpop.xlane.xlu0 %271
  %v273 = vsel %vm122, %v267, 0.0
  %274 = vadd.xlane.f32.xlu0 %v273
  %v275 = vpop.xlane.xlu0 %274
  %v276 = vlog2.pop %v272
  %v277 = vmul.f32 %v276, 0.6931472
  %v278 = vlog2.pop %v275
  %v279 = vmul.f32 %v278, 0.6931472
  %v280 = vadd.f32 %v125, %v277
  %v281 = vadd.f32 %v128, %v279
  %v282 = vmul.f32 %v264, %v114
  %v283 = vmul.f32 %v265, %v119
  %v284 = vsel %vm122, %v282, 0.0
  %285 = vadd.xlane.f32.xlu0 %v284
  %v286 = vpop.xlane.xlu0 %285
  %v287 = vsel %vm122, %v283, 0.0
  %288 = vadd.xlane.f32.xlu0 %v287
  %v289 = vpop.xlane.xlu0 %288
  %v290 = vmul.f32 %v268, %v280
  %v291 = vmul.f32 %v269, %v281
  %v292 = vsub.f32 %v286, %v290
  %v293 = vsub.f32 %v289, %v291
  %v294 = vadd.f32 %v268, 1e-08
  %v295 = vadd.f32 %v269, 1e-08
  %v296 = vrcp.pop %v294
  %v297 = vmul.f32 %v292, %v296
  %v298 = vrcp.pop %v295
  %v299 = vmul.f32 %v293, %v298
  %v300 = vmul.f32 %v297, -1.0
  %v301 = vmul.f32 %v299, -1.0
  %vm302 = vcmask 7168
  %303 = vst.msk [vmem:[%s2] sm:$0xff] %vm302, %v300
  %304 = vst.msk [vmem:[%s2 + $0x8] sm:$0xff] %vm302, %v301
  // Predicated region
  $region10: #{tpu_custom_call.1} parent=0 // pred_check
    _
  $region11: #{tpu_custom_call.1} parent=0 // pred_check_branch
    %306 = sbr.rel (0) target = $region13
  $region12: #{tpu_custom_call.1} parent=0 // pred_region
    _
  $region13: #{tpu_custom_call.1} parent=0 // pred_fallthru
    _
  // Predicated region
  $region14: #{tpu_custom_call.1} parent=0 // pred_check
    _
  $region15: #{tpu_custom_call.1} parent=0 // pred_check_branch
    %308 = sbr.rel (0) target = $region17
  $region16: #{tpu_custom_call.1} parent=0 // pred_region
    _
  $region17: #{tpu_custom_call.1} parent=0 // pred_fallthru
    _

</llo_original>
